<compile_context>
chip_gen: v6e
topology: v6e:2x2x1
jax: 0.10.0
libtpu: 0.0.40
codegen_flags: <defaults>
</compile_context>

<pallas_src>
import math

import jax
import jax.numpy as jnp
from jax.experimental import pallas as pl
from jax.experimental.pallas import tpu as pltpu

IN_F, HID_F, OUT_F = 1000, 100, 10          # logical (PyTorch) dims
IN_P, HID_P, OUT_P = 1024, 128, 128         # lane-padded dims
TILE_B = 512                                 # batch tile (fits all TPU gens)


def _round_up(x, m):
    return ((x + m - 1) // m) * m


def tiny_mlp_kernel(x_ref, w1_ref, b1_ref, w2_ref, b2_ref, o_ref):
    x = x_ref[...]            # (tb, 1024)  bf16
    w1 = w1_ref[...]          # (1024, 128) bf16   (already transposed: in x out)
    b1 = b1_ref[...]          # (1, 128)    f32
    w2 = w2_ref[...]          # (128, 128)  bf16
    b2 = b2_ref[...]          # (1, 128)    f32

    # layer1: bf16 MXU matmul, f32 accumulate, bias + ReLU on the VPU.
    h = jnp.dot(x, w1, preferred_element_type=jnp.float32) + b1
    h = jnp.maximum(h, 0.0)

    # layer2: lane-dense (128-wide) bf16 matmul, f32 accumulate.
    y = jnp.dot(h.astype(jnp.bfloat16), w2,
                preferred_element_type=jnp.float32) + b2
    o_ref[...] = y.astype(o_ref.dtype)


def tiny_model_forward(x, w1, b1, w2, b2, *, tile_b=TILE_B):
    """x: (B, 1000) f32; w1: (100, 1000); b1: (100,); w2: (10, 100); b2: (10,)."""
    B = x.shape[0]

    # One-time (outside-kernel) weight prep: transpose to (in, out), zero-pad
    # to lane multiples, cast to bf16. Biases stay f32 (added to f32 acc).
    w1_p = jnp.zeros((IN_P, HID_P), jnp.bfloat16)
    w1_p = w1_p.at[:IN_F, :HID_F].set(w1.T.astype(jnp.bfloat16))
    w2_p = jnp.zeros((HID_P, OUT_P), jnp.bfloat16)
    w2_p = w2_p.at[:HID_F, :OUT_F].set(w2.T.astype(jnp.bfloat16))
    b1_p = jnp.zeros((1, HID_P), jnp.float32).at[0, :HID_F].set(b1.astype(jnp.float32))
    b2_p = jnp.zeros((1, OUT_P), jnp.float32).at[0, :OUT_F].set(b2.astype(jnp.float32))

    # Batch tiling: pad B up to a multiple of the tile (tile itself is a
    # multiple of 16 so bf16 sublane packing stays aligned).
    tb = min(tile_b, _round_up(B, 16))
    b_pad = pl.cdiv(B, tb) * tb
    x_p = jnp.zeros((b_pad, IN_P), jnp.bfloat16)
    x_p = x_p.at[:B, :IN_F].set(x.astype(jnp.bfloat16))

    out = pl.pallas_call(
        tiny_mlp_kernel,
        out_shape=jax.ShapeDtypeStruct((b_pad, OUT_P), jnp.float32),
        grid=(b_pad // tb,),
        in_specs=[
            pl.BlockSpec((tb, IN_P), lambda i: (i, 0)),      # activations: streamed per tile
            pl.BlockSpec((IN_P, HID_P), lambda i: (0, 0)),   # weights/biases: resident
            pl.BlockSpec((1, HID_P), lambda i: (0, 0)),
            pl.BlockSpec((HID_P, OUT_P), lambda i: (0, 0)),
            pl.BlockSpec((1, OUT_P), lambda i: (0, 0)),
        ],
        out_specs=pl.BlockSpec((tb, OUT_P), lambda i: (i, 0)),
        compiler_params=pltpu.CompilerParams(
            dimension_semantics=("parallel",)),              # megacore sharding on v7x
    )(x_p, w1_p, b1_p, w2_p, b2_p)

    return out[:B, :OUT_F]


def init_params(key):
    """Deterministic init mirroring torch.nn.Linear defaults (kaiming-uniform)."""
    k1, k2, k3, k4 = jax.random.split(key, 4)
    bound1 = 1.0 / math.sqrt(IN_F)
    w1 = jax.random.uniform(k1, (HID_F, IN_F), jnp.float32, -bound1, bound1)
    b1 = jax.random.uniform(k2, (HID_F,), jnp.float32, -bound1, bound1)
    bound2 = 1.0 / math.sqrt(HID_F)
    w2 = jax.random.uniform(k3, (OUT_F, HID_F), jnp.float32, -bound2, bound2)
    b2 = jax.random.uniform(k4, (OUT_F,), jnp.float32, -bound2, bound2)
    return w1, b1, w2, b2


if __name__ == "__main__":
    key = jax.random.PRNGKey(0)
    k_x, k_p = jax.random.split(key)

    B = 8
    x = jax.random.normal(k_x, (B, IN_F), jnp.float32)
    w1, b1, w2, b2 = init_params(k_p)

    out = tiny_model_forward(x, w1, b1, w2, b2)
    out = jax.block_until_ready(out)
    assert out.shape == (B, OUT_F)

    # Tight check: same bf16-quantized math in plain JAX (matches MXU path
    # up to f32 accumulation order).
    xb = x.astype(jnp.bfloat16).astype(jnp.float32)
    w1b = w1.astype(jnp.bfloat16).astype(jnp.float32)
    w2b = w2.astype(jnp.bfloat16).astype(jnp.float32)
    h_ref = jnp.maximum(xb @ w1b.T + b1, 0.0)
    h_ref = h_ref.astype(jnp.bfloat16).astype(jnp.float32)
    ref_bf16 = h_ref @ w2b.T + b2
    assert jnp.allclose(out, ref_bf16, atol=1e-2, rtol=1e-2)

    # Loose sanity check vs the full-f32 reference (bf16 quantization drift).
    ref_f32 = jnp.maximum(x @ w1.T + b1, 0.0) @ w2.T + b2
    assert jnp.allclose(out, ref_f32, atol=5e-2, rtol=5e-2)

    print("KERNEL_OK")
</pallas_src>

<mosaic_0001>
module attributes {stable_mosaic.version = 11 : i64} {
  func.func @tiny_mlp_kernel(%arg0: i32, %arg1: memref<16x1024xbf16, #tpu.memory_space<vmem>>, %arg2: memref<1024x128xbf16, #tpu.memory_space<vmem>>, %arg3: memref<1x128xf32, #tpu.memory_space<vmem>>, %arg4: memref<128x128xbf16, #tpu.memory_space<vmem>>, %arg5: memref<1x128xf32, #tpu.memory_space<vmem>>, %arg6: memref<16x128xf32, #tpu.memory_space<vmem>>) attributes {dimension_semantics = [#tpu.dimension_semantics<parallel>], iteration_bounds = array<i64: 1>, scalar_prefetch = 0 : i64, scratch_operands = 0 : i64, tpu.core_type = #tpu.core_type<tc>, window_params = [{transform_indices = @transform_0, window_bounds = array<i64: 16, 1024>}, {pipeline_mode = #tpu.pipeline_mode<synchronous>, transform_indices = @transform_1, window_bounds = array<i64: 1024, 128>}, {pipeline_mode = #tpu.pipeline_mode<synchronous>, transform_indices = @transform_2, window_bounds = array<i64: 1, 128>}, {pipeline_mode = #tpu.pipeline_mode<synchronous>, transform_indices = @transform_3, window_bounds = array<i64: 128, 128>}, {pipeline_mode = #tpu.pipeline_mode<synchronous>, transform_indices = @transform_4, window_bounds = array<i64: 1, 128>}, {transform_indices = @transform_5, window_bounds = array<i64: 16, 128>}]} {
    %c0 = arith.constant 0 : index
    %c0_0 = arith.constant 0 : index
    %0 = vector.load %arg1[%c0, %c0_0] : memref<16x1024xbf16, #tpu.memory_space<vmem>>, vector<16x1024xbf16>
    %c0_1 = arith.constant 0 : index
    %c0_2 = arith.constant 0 : index
    %1 = vector.load %arg2[%c0_1, %c0_2] : memref<1024x128xbf16, #tpu.memory_space<vmem>>, vector<1024x128xbf16>
    %c0_3 = arith.constant 0 : index
    %c0_4 = arith.constant 0 : index
    %2 = vector.load %arg3[%c0_3, %c0_4] : memref<1x128xf32, #tpu.memory_space<vmem>>, vector<1x128xf32>
    %c0_5 = arith.constant 0 : index
    %c0_6 = arith.constant 0 : index
    %3 = vector.load %arg4[%c0_5, %c0_6] : memref<128x128xbf16, #tpu.memory_space<vmem>>, vector<128x128xbf16>
    %c0_7 = arith.constant 0 : index
    %c0_8 = arith.constant 0 : index
    %4 = vector.load %arg5[%c0_7, %c0_8] : memref<1x128xf32, #tpu.memory_space<vmem>>, vector<1x128xf32>
    %cst = arith.constant dense<0.000000e+00> : vector<16x128xf32>
    %5 = tpu.matmul %0, %1, %cst {dimension_numbers = #tpu.dot_dimension_numbers<[1], [0], [0], [1], [0, 0, 1, 1], [], []>} : vector<16x1024xbf16>, vector<1024x128xbf16>, vector<16x128xf32> -> vector<16x128xf32>
    %6 = vector.broadcast %2 : vector<1x128xf32> to vector<16x128xf32>
    %7 = arith.addf %5, %6 : vector<16x128xf32>
    %cst_9 = arith.constant 0.000000e+00 : f32
    %8 = vector.broadcast %cst_9 : f32 to vector<16x128xf32>
    %9 = arith.maximumf %7, %8 : vector<16x128xf32>
    %10 = arith.truncf %9 : vector<16x128xf32> to vector<16x128xbf16>
    %cst_10 = arith.constant dense<0.000000e+00> : vector<16x128xf32>
    %11 = tpu.matmul %10, %3, %cst_10 {dimension_numbers = #tpu.dot_dimension_numbers<[1], [0], [0], [1], [0, 0, 1, 1], [], []>} : vector<16x128xbf16>, vector<128x128xbf16>, vector<16x128xf32> -> vector<16x128xf32>
    %12 = vector.broadcast %4 : vector<1x128xf32> to vector<16x128xf32>
    %13 = arith.addf %11, %12 : vector<16x128xf32>
    %c0_11 = arith.constant 0 : index
    %c0_12 = arith.constant 0 : index
    %14 = vector.load %arg6[%c0_11, %c0_12] : memref<16x128xf32, #tpu.memory_space<vmem>>, vector<16x128xf32>
    tpu.vector_store %arg6[%c0_11, %c0_12], %13 {strides = array<i32>} : memref<16x128xf32, #tpu.memory_space<vmem>>, vector<16x128xf32>,
    return
  }
  func.func @transform_0(%arg0: i32) -> (i32, i32) {
    %c0_i32 = arith.constant 0 : i32
    %c0_i32_0 = arith.constant 0 : i32
    return %arg0, %c0_i32 : i32, i32
  }
  func.func @transform_1(%arg0: i32) -> (i32, i32) {
    %c0_i32 = arith.constant 0 : i32
    %c0_i32_0 = arith.constant 0 : i32
    %c0_i32_1 = arith.constant 0 : i32
    return %c0_i32, %c0_i32_0 : i32, i32
  }
  func.func @transform_2(%arg0: i32) -> (i32, i32) {
    %c0_i32 = arith.constant 0 : i32
    %c0_i32_0 = arith.constant 0 : i32
    %c0_i32_1 = arith.constant 0 : i32
    return %c0_i32, %c0_i32_0 : i32, i32
  }
  func.func @transform_3(%arg0: i32) -> (i32, i32) {
    %c0_i32 = arith.constant 0 : i32
    %c0_i32_0 = arith.constant 0 : i32
    %c0_i32_1 = arith.constant 0 : i32
    return %c0_i32, %c0_i32_0 : i32, i32
  }
  func.func @transform_4(%arg0: i32) -> (i32, i32) {
    %c0_i32 = arith.constant 0 : i32
    %c0_i32_0 = arith.constant 0 : i32
    %c0_i32_1 = arith.constant 0 : i32
    return %c0_i32, %c0_i32_0 : i32, i32
  }
  func.func @transform_5(%arg0: i32) -> (i32, i32) {
    %c0_i32 = arith.constant 0 : i32
    %c0_i32_0 = arith.constant 0 : i32
    return %arg0, %c0_i32 : i32, i32
  }
}

</mosaic_0001>

<llo_original>
// kernel: tpu_custom_call.1
$region0: #{tpu_custom_call.1}
  #allocation0 [shape = 'u32[]', space=smem, size = 0x4, offset = 0x4, fixed_abs, tag = 'smem constant byte address 0x4 - core index']
  #allocation1 [shape = 'u32[144,128]{1,0:T(1,128)}', space=vmem, size = 0x12000, scoped, tag = 'internal scratch']
  %s0 = inlined_call_operand.hbm [shape: bf16[16,1024], index: 0, kind: input, shape index: {}]
  %s1 = inlined_call_operand.hbm [shape: bf16[1024,128], index: 1, kind: input, shape index: {}]
  %s2 = inlined_call_operand.vmem [shape: f32[1,128], index: 2, kind: input, shape index: {}]
  %s3 = inlined_call_operand.hbm [shape: bf16[128,128], index: 3, kind: input, shape index: {}]
  %s4 = inlined_call_operand.vmem [shape: f32[1,128], index: 4, kind: input, shape index: {}]
  %s5 = inlined_call_operand.hbm [shape: f32[16,128], index: 5, kind: output, shape index: {}]
  %s6 = sld [smem:[#allocation0]]
  $region42: #{tpu_custom_call.1} parent=0
    _
  %s8 = ssub.s32 1, %s6
  %s9 = scalar_select 0, %s8, %s6
  $region1: #{tpu_custom_call.1} parent=0
    #allocation2 [shape = 'u8[32768]{0}', space=vmem, size = 0x8000, scoped, tag = 'input window, operand 0, single buffered']
    #allocation3 [shape = 's32[1]{0}', space=sflag, size = 0x4, scoped, tag = 'scoped memory for tpu_custom_call.1']
    #allocation4 [shape = 's32[1]{0}', space=sflag, size = 0x4, scoped, tag = 'scoped memory for tpu_custom_call.1']
    #allocation5 [shape = 'u8[262144]{0}', space=vmem, size = 0x40000, scoped, tag = 'input window, operand 1, single buffered']
    #allocation6 [shape = 's32[1]{0}', space=sflag, size = 0x4, scoped, tag = 'scoped memory for tpu_custom_call.1']
    #allocation7 [shape = 'u8[32768]{0}', space=vmem, size = 0x8000, scoped, tag = 'input window, operand 3, single buffered']
    #allocation8 [shape = 'u8[8192]{0}', space=vmem, size = 0x2000, scoped, tag = 'output window, operand 0, single buffered']
    %10 = vsyncpa [#allocation3], 0
    %11 = vsyncpa [#allocation6], 0
    %12 = vsyncpa [#allocation4], 0
    // Predicated region
    $region2: #{tpu_custom_call.1} parent=1 // pred_check
      _
    $region3: #{tpu_custom_call.1} parent=1 // pred_check_branch
      %14 = sbr.rel (0) target = $region5
    $region4: #{tpu_custom_call.1} parent=1 // pred_region
      %s16 = ssub.s32 1024, 1024
      %17 = vsyncadd [#allocation3], %s16
      %s18 = sshll.u32 [#allocation2], 4
      %s19 = int_to_ptr.vmem [resolvable:$true] %s18
      %24 = dma.hbm_to_vmem [thread:$0]  %s0, 1024, %s19, [#allocation3], 512, 512, 32
    $region5: #{tpu_custom_call.1} parent=1 // pred_fallthru
      _
    // Predicated region
    $region6: #{tpu_custom_call.1} parent=1 // pred_check
      _
    $region7: #{tpu_custom_call.1} parent=1 // pred_check_branch
      %26 = sbr.rel (0) target = $region9
    $region8: #{tpu_custom_call.1} parent=1 // pred_region
      %s28 = ssub.s32 8192, 8192
      %29 = vsyncadd [#allocation6], %s28
      %s30 = sshll.u32 [#allocation5], 4
      %s31 = int_to_ptr.vmem [resolvable:$true] %s30
      %36 = dma.hbm_to_vmem [thread:$0]  %s1, 8192, %s31, [#allocation6], 64, 64, 4
    $region9: #{tpu_custom_call.1} parent=1 // pred_fallthru
      _
    // Predicated region
    $region10: #{tpu_custom_call.1} parent=1 // pred_check
      _
    $region11: #{tpu_custom_call.1} parent=1 // pred_check_branch
      %38 = sbr.rel (0) target = $region13
    $region12: #{tpu_custom_call.1} parent=1 // pred_region
      _
    $region13: #{tpu_custom_call.1} parent=1 // pred_fallthru
      _
    // Predicated region
    $region14: #{tpu_custom_call.1} parent=1 // pred_check
      _
    $region15: #{tpu_custom_call.1} parent=1 // pred_check_branch
      %40 = sbr.rel (0) target = $region17
    $region16: #{tpu_custom_call.1} parent=1 // pred_region
      %s42 = ssub.s32 1024, 1024
      %43 = vsyncadd [#allocation6], %s42
      %s44 = sshll.u32 [#allocation7], 4
      %s45 = int_to_ptr.vmem [resolvable:$true] %s44
      %50 = dma.hbm_to_vmem [thread:$0]  %s3, 1024, %s45, [#allocation6], 64, 64, 4
    $region17: #{tpu_custom_call.1} parent=1 // pred_fallthru
      _
    // Predicated region
    $region18: #{tpu_custom_call.1} parent=1 // pred_check
      _
    $region19: #{tpu_custom_call.1} parent=1 // pred_check_branch
      %52 = sbr.rel (0) target = $region21
    $region20: #{tpu_custom_call.1} parent=1 // pred_region
      _
    $region21: #{tpu_custom_call.1} parent=1 // pred_fallthru
      _
    // Predicated region
    $region22: #{tpu_custom_call.1} parent=1 // pred_check
      _
    $region23: #{tpu_custom_call.1} parent=1 // pred_check_branch
      %54 = sbr.rel (0) target = $region25
    $region24: #{tpu_custom_call.1} parent=1 // pred_region
      %55 = dma.done [#allocation3], 1024
    $region25: #{tpu_custom_call.1} parent=1 // pred_fallthru
      _
    // Predicated region
    $region26: #{tpu_custom_call.1} parent=1 // pred_check
      _
    $region27: #{tpu_custom_call.1} parent=1 // pred_check_branch
      %57 = sbr.rel (0) target = $region29
    $region28: #{tpu_custom_call.1} parent=1 // pred_region
      %58 = dma.done [#allocation6], 8192
    $region29: #{tpu_custom_call.1} parent=1 // pred_fallthru
      _
    // Predicated region
    $region30: #{tpu_custom_call.1} parent=1 // pred_check
      _
    $region31: #{tpu_custom_call.1} parent=1 // pred_check_branch
      %60 = sbr.rel (0) target = $region33
    $region32: #{tpu_custom_call.1} parent=1 // pred_region
      %61 = dma.done [#allocation6], 1024
    $region33: #{tpu_custom_call.1} parent=1 // pred_fallthru
      _
    %v63 = vld [vmem:[#allocation2] sm:$0xff]
    %v64 = vld [vmem:[#allocation2 + $0x8] sm:$0xff]
    %v65 = vld [vmem:[#allocation2 + $0x10] sm:$0xff]
    %v66 = vld [vmem:[#allocation2 + $0x18] sm:$0xff]
    %v67 = vld [vmem:[#allocation2 + $0x20] sm:$0xff]
    %v68 = vld [vmem:[#allocation2 + $0x28] sm:$0xff]
    %v69 = vld [vmem:[#allocation2 + $0x30] sm:$0xff]
    %v70 = vld [vmem:[#allocation2 + $0x38] sm:$0xff]
    %v71 = vld [vmem:[#allocation5] sm:$0xf]
    %v72 = vld [vmem:[#allocation5 + $0x4] sm:$0xf]
    %v73 = vld [vmem:[#allocation5 + $0x8] sm:$0xf]
    %v74 = vld [vmem:[#allocation5 + $0xc] sm:$0xf]
    %v75 = vld [vmem:[#allocation5 + $0x10] sm:$0xf]
    %v76 = vld [vmem:[#allocation5 + $0x14] sm:$0xf]
    %v77 = vld [vmem:[#allocation5 + $0x18] sm:$0xf]
    %v78 = vld [vmem:[#allocation5 + $0x1c] sm:$0xf]
    %v79 = vld [vmem:[#allocation5 + $0x20] sm:$0xf]
    %v80 = vld [vmem:[#allocation5 + $0x24] sm:$0xf]
    %v81 = vld [vmem:[#allocation5 + $0x28] sm:$0xf]
    %v82 = vld [vmem:[#allocation5 + $0x2c] sm:$0xf]
    %v83 = vld [vmem:[#allocation5 + $0x30] sm:$0xf]
    %v84 = vld [vmem:[#allocation5 + $0x34] sm:$0xf]
    %v85 = vld [vmem:[#allocation5 + $0x38] sm:$0xf]
    %v86 = vld [vmem:[#allocation5 + $0x3c] sm:$0xf]
    %v87 = vld [vmem:[#allocation5 + $0x40] sm:$0xf]
    %v88 = vld [vmem:[#allocation5 + $0x44] sm:$0xf]
    %v89 = vld [vmem:[#allocation5 + $0x48] sm:$0xf]
    %v90 = vld [vmem:[#allocation5 + $0x4c] sm:$0xf]
    %v91 = vld [vmem:[#allocation5 + $0x50] sm:$0xf]
    %v92 = vld [vmem:[#allocation5 + $0x54] sm:$0xf]
    %v93 = vld [vmem:[#allocation5 + $0x58] sm:$0xf]
    %v94 = vld [vmem:[#allocation5 + $0x5c] sm:$0xf]
    %v95 = vld [vmem:[#allocation5 + $0x60] sm:$0xf]
    %v96 = vld [vmem:[#allocation5 + $0x64] sm:$0xf]
    %v97 = vld [vmem:[#allocation5 + $0x68] sm:$0xf]
    %v98 = vld [vmem:[#allocation5 + $0x6c] sm:$0xf]
    %v99 = vld [vmem:[#allocation5 + $0x70] sm:$0xf]
    %v100 = vld [vmem:[#allocation5 + $0x74] sm:$0xf]
    %v101 = vld [vmem:[#allocation5 + $0x78] sm:$0xf]
    %v102 = vld [vmem:[#allocation5 + $0x7c] sm:$0xf]
    %v103 = vld [vmem:[#allocation5 + $0x80] sm:$0xf]
    %v104 = vld [vmem:[#allocation5 + $0x84] sm:$0xf]
    %v105 = vld [vmem:[#allocation5 + $0x88] sm:$0xf]
    %v106 = vld [vmem:[#allocation5 + $0x8c] sm:$0xf]
    %v107 = vld [vmem:[#allocation5 + $0x90] sm:$0xf]
    %v108 = vld [vmem:[#allocation5 + $0x94] sm:$0xf]
    %v109 = vld [vmem:[#allocation5 + $0x98] sm:$0xf]
    %v110 = vld [vmem:[#allocation5 + $0x9c] sm:$0xf]
    %v111 = vld [vmem:[#allocation5 + $0xa0] sm:$0xf]
    %v112 = vld [vmem:[#allocation5 + $0xa4] sm:$0xf]
    %v113 = vld [vmem:[#allocation5 + $0xa8] sm:$0xf]
    %v114 = vld [vmem:[#allocation5 + $0xac] sm:$0xf]
    %v115 = vld [vmem:[#allocation5 + $0xb0] sm:$0xf]
    %v116 = vld [vmem:[#allocation5 + $0xb4] sm:$0xf]
    %v117 = vld [vmem:[#allocation5 + $0xb8] sm:$0xf]
    %v118 = vld [vmem:[#allocation5 + $0xbc] sm:$0xf]
    %v119 = vld [vmem:[#allocation5 + $0xc0] sm:$0xf]
    %v120 = vld [vmem:[#allocation5 + $0xc4] sm:$0xf]
    %v121 = vld [vmem:[#allocation5 + $0xc8] sm:$0xf]
    %v122 = vld [vmem:[#allocation5 + $0xcc] sm:$0xf]
    %v123 = vld [vmem:[#allocation5 + $0xd0] sm:$0xf]
    %v124 = vld [vmem:[#allocation5 + $0xd4] sm:$0xf]
    %v125 = vld [vmem:[#allocation5 + $0xd8] sm:$0xf]
    %v126 = vld [vmem:[#allocation5 + $0xdc] sm:$0xf]
    %v127 = vld [vmem:[#allocation5 + $0xe0] sm:$0xf]
    %v128 = vld [vmem:[#allocation5 + $0xe4] sm:$0xf]
    %v129 = vld [vmem:[#allocation5 + $0xe8] sm:$0xf]
    %v130 = vld [vmem:[#allocation5 + $0xec] sm:$0xf]
    %v131 = vld [vmem:[#allocation5 + $0xf0] sm:$0xf]
    %v132 = vld [vmem:[#allocation5 + $0xf4] sm:$0xf]
    %v133 = vld [vmem:[#allocation5 + $0xf8] sm:$0xf]
    %v134 = vld [vmem:[#allocation5 + $0xfc] sm:$0xf]
    %v135 = vld [vmem:[#allocation5 + $0x100] sm:$0xf]
    %v136 = vld [vmem:[#allocation5 + $0x104] sm:$0xf]
    %v137 = vld [vmem:[#allocation5 + $0x108] sm:$0xf]
    %v138 = vld [vmem:[#allocation5 + $0x10c] sm:$0xf]
    %v139 = vld [vmem:[#allocation5 + $0x110] sm:$0xf]
    %v140 = vld [vmem:[#allocation5 + $0x114] sm:$0xf]
    %v141 = vld [vmem:[#allocation5 + $0x118] sm:$0xf]
    %v142 = vld [vmem:[#allocation5 + $0x11c] sm:$0xf]
    %v143 = vld [vmem:[#allocation5 + $0x120] sm:$0xf]
    %v144 = vld [vmem:[#allocation5 + $0x124] sm:$0xf]
    %v145 = vld [vmem:[#allocation5 + $0x128] sm:$0xf]
    %v146 = vld [vmem:[#allocation5 + $0x12c] sm:$0xf]
    %v147 = vld [vmem:[#allocation5 + $0x130] sm:$0xf]
    %v148 = vld [vmem:[#allocation5 + $0x134] sm:$0xf]
    %v149 = vld [vmem:[#allocation5 + $0x138] sm:$0xf]
    %v150 = vld [vmem:[#allocation5 + $0x13c] sm:$0xf]
    %v151 = vld [vmem:[#allocation5 + $0x140] sm:$0xf]
    %v152 = vld [vmem:[#allocation5 + $0x144] sm:$0xf]
    %v153 = vld [vmem:[#allocation5 + $0x148] sm:$0xf]
    %v154 = vld [vmem:[#allocation5 + $0x14c] sm:$0xf]
    %v155 = vld [vmem:[#allocation5 + $0x150] sm:$0xf]
    %v156 = vld [vmem:[#allocation5 + $0x154] sm:$0xf]
    %v157 = vld [vmem:[#allocation5 + $0x158] sm:$0xf]
    %v158 = vld [vmem:[#allocation5 + $0x15c] sm:$0xf]
    %v159 = vld [vmem:[#allocation5 + $0x160] sm:$0xf]
    %v160 = vld [vmem:[#allocation5 + $0x164] sm:$0xf]
    %v161 = vld [vmem:[#allocation5 + $0x168] sm:$0xf]
    %v162 = vld [vmem:[#allocation5 + $0x16c] sm:$0xf]
    %v163 = vld [vmem:[#allocation5 + $0x170] sm:$0xf]
    %v164 = vld [vmem:[#allocation5 + $0x174] sm:$0xf]
    %v165 = vld [vmem:[#allocation5 + $0x178] sm:$0xf]
    %v166 = vld [vmem:[#allocation5 + $0x17c] sm:$0xf]
    %v167 = vld [vmem:[#allocation5 + $0x180] sm:$0xf]
    %v168 = vld [vmem:[#allocation5 + $0x184] sm:$0xf]
    %v169 = vld [vmem:[#allocation5 + $0x188] sm:$0xf]
    %v170 = vld [vmem:[#allocation5 + $0x18c] sm:$0xf]
    %v171 = vld [vmem:[#allocation5 + $0x190] sm:$0xf]
    %v172 = vld [vmem:[#allocation5 + $0x194] sm:$0xf]
    %v173 = vld [vmem:[#allocation5 + $0x198] sm:$0xf]
    %v174 = vld [vmem:[#allocation5 + $0x19c] sm:$0xf]
    %v175 = vld [vmem:[#allocation5 + $0x1a0] sm:$0xf]
    %v176 = vld [vmem:[#allocation5 + $0x1a4] sm:$0xf]
    %v177 = vld [vmem:[#allocation5 + $0x1a8] sm:$0xf]
    %v178 = vld [vmem:[#allocation5 + $0x1ac] sm:$0xf]
    %v179 = vld [vmem:[#allocation5 + $0x1b0] sm:$0xf]
    %v180 = vld [vmem:[#allocation5 + $0x1b4] sm:$0xf]
    %v181 = vld [vmem:[#allocation5 + $0x1b8] sm:$0xf]
    %v182 = vld [vmem:[#allocation5 + $0x1bc] sm:$0xf]
    %v183 = vld [vmem:[#allocation5 + $0x1c0] sm:$0xf]
    %v184 = vld [vmem:[#allocation5 + $0x1c4] sm:$0xf]
    %v185 = vld [vmem:[#allocation5 + $0x1c8] sm:$0xf]
    %v186 = vld [vmem:[#allocation5 + $0x1cc] sm:$0xf]
    %v187 = vld [vmem:[#allocation5 + $0x1d0] sm:$0xf]
    %v188 = vld [vmem:[#allocation5 + $0x1d4] sm:$0xf]
    %v189 = vld [vmem:[#allocation5 + $0x1d8] sm:$0xf]
    %v190 = vld [vmem:[#allocation5 + $0x1dc] sm:$0xf]
    %v191 = vld [vmem:[#allocation5 + $0x1e0] sm:$0xf]
    %v192 = vld [vmem:[#allocation5 + $0x1e4] sm:$0xf]
    %v193 = vld [vmem:[#allocation5 + $0x1e8] sm:$0xf]
    %v194 = vld [vmem:[#allocation5 + $0x1ec] sm:$0xf]
    %v195 = vld [vmem:[#allocation5 + $0x1f0] sm:$0xf]
    %v196 = vld [vmem:[#allocation5 + $0x1f4] sm:$0xf]
    %v197 = vld [vmem:[#allocation5 + $0x1f8] sm:$0xf]
    %v198 = vld [vmem:[#allocation5 + $0x1fc] sm:$0xf]
    %v199 = vld [vmem:[%s2] sm:$0x1]
    %v200 = vld [vmem:[#allocation7] sm:$0xf]
    %v201 = vld [vmem:[#allocation7 + $0x4] sm:$0xf]
    %v202 = vld [vmem:[#allocation7 + $0x8] sm:$0xf]
    %v203 = vld [vmem:[#allocation7 + $0xc] sm:$0xf]
    %v204 = vld [vmem:[#allocation7 + $0x10] sm:$0xf]
    %v205 = vld [vmem:[#allocation7 + $0x14] sm:$0xf]
    %v206 = vld [vmem:[#allocation7 + $0x18] sm:$0xf]
    %v207 = vld [vmem:[#allocation7 + $0x1c] sm:$0xf]
    %v208 = vld [vmem:[#allocation7 + $0x20] sm:$0xf]
    %v209 = vld [vmem:[#allocation7 + $0x24] sm:$0xf]
    %v210 = vld [vmem:[#allocation7 + $0x28] sm:$0xf]
    %v211 = vld [vmem:[#allocation7 + $0x2c] sm:$0xf]
    %v212 = vld [vmem:[#allocation7 + $0x30] sm:$0xf]
    %v213 = vld [vmem:[#allocation7 + $0x34] sm:$0xf]
    %v214 = vld [vmem:[#allocation7 + $0x38] sm:$0xf]
    %v215 = vld [vmem:[#allocation7 + $0x3c] sm:$0xf]
    %v216 = vld [vmem:[%s4] sm:$0x1]
    %v218 = vlaneseq
    %v219 = vshrl.u32 %v218, 7
    %v220 = vsub.s32 0, %v219
    %v221 = vrot.slane %v199, %v220
    %v231 = vunpack.c.l.b16 %v63
    %v232 = vunpack.c.h.b16 %v63
    %v233 = vunpack.c.l.b16 %v64
    %v234 = vunpack.c.h.b16 %v64
    %v235 = vunpack.c.l.b16 %v65
    %v236 = vunpack.c.h.b16 %v65
    %v237 = vunpack.c.l.b16 %v66
    %v238 = vunpack.c.h.b16 %v66
    %v239 = vunpack.c.l.b16 %v67
    %v240 = vunpack.c.h.b16 %v67
    %v241 = vunpack.c.l.b16 %v68
    %v242 = vunpack.c.h.b16 %v68
    %v243 = vunpack.c.l.b16 %v69
    %v244 = vunpack.c.h.b16 %v69
    %v245 = vunpack.c.l.b16 %v70
    %v246 = vunpack.c.h.b16 %v70
    %v247 = vpack.c.b16 %v239, %v231
    %v248 = vpack.c.b16 %v240, %v232
    %v249 = vpack.c.b16 %v241, %v233
    %v250 = vpack.c.b16 %v242, %v234
    %v251 = vpack.c.b16 %v243, %v235
    %v252 = vpack.c.b16 %v244, %v236
    %v253 = vpack.c.b16 %v245, %v237
    %v254 = vpack.c.b16 %v246, %v238
    %v391 = vunpack.c.l.b16 %v71
    %v392 = vunpack.c.l.b16 %v72
    %v393 = vunpack.c.l.b16 %v73
    %v394 = vunpack.c.l.b16 %v74
    %v395 = vunpack.c.l.b16 %v75
    %v396 = vunpack.c.l.b16 %v76
    %v397 = vunpack.c.l.b16 %v77
    %v398 = vunpack.c.l.b16 %v78
    %v399 = vunpack.c.l.b16 %v79
    %v400 = vunpack.c.l.b16 %v80
    %v401 = vunpack.c.l.b16 %v81
    %v402 = vunpack.c.l.b16 %v82
    %v403 = vunpack.c.l.b16 %v83
    %v404 = vunpack.c.l.b16 %v84
    %v405 = vunpack.c.l.b16 %v85
    %v406 = vunpack.c.l.b16 %v86
    %v407 = vunpack.c.l.b16 %v87
    %v408 = vunpack.c.l.b16 %v88
    %v409 = vunpack.c.l.b16 %v89
    %v410 = vunpack.c.l.b16 %v90
    %v411 = vunpack.c.l.b16 %v91
    %v412 = vunpack.c.l.b16 %v92
    %v413 = vunpack.c.l.b16 %v93
    %v414 = vunpack.c.l.b16 %v94
    %v415 = vunpack.c.l.b16 %v95
    %v416 = vunpack.c.l.b16 %v96
    %v417 = vunpack.c.l.b16 %v97
    %v418 = vunpack.c.l.b16 %v98
    %v419 = vunpack.c.l.b16 %v99
    %v420 = vunpack.c.l.b16 %v100
    %v421 = vunpack.c.l.b16 %v101
    %v422 = vunpack.c.l.b16 %v102
    %v423 = vunpack.c.l.b16 %v103
    %v424 = vunpack.c.l.b16 %v104
    %v425 = vunpack.c.l.b16 %v105
    %v426 = vunpack.c.l.b16 %v106
    %v427 = vunpack.c.l.b16 %v107
    %v428 = vunpack.c.l.b16 %v108
    %v429 = vunpack.c.l.b16 %v109
    %v430 = vunpack.c.l.b16 %v110
    %v431 = vunpack.c.l.b16 %v111
    %v432 = vunpack.c.l.b16 %v112
    %v433 = vunpack.c.l.b16 %v113
    %v434 = vunpack.c.l.b16 %v114
    %v435 = vunpack.c.l.b16 %v115
    %v436 = vunpack.c.l.b16 %v116
    %v437 = vunpack.c.l.b16 %v117
    %v438 = vunpack.c.l.b16 %v118
    %v439 = vunpack.c.l.b16 %v119
    %v440 = vunpack.c.l.b16 %v120
    %v441 = vunpack.c.l.b16 %v121
    %v442 = vunpack.c.l.b16 %v122
    %v443 = vunpack.c.l.b16 %v123
    %v444 = vunpack.c.l.b16 %v124
    %v445 = vunpack.c.l.b16 %v125
    %v446 = vunpack.c.l.b16 %v126
    %v447 = vunpack.c.l.b16 %v127
    %v448 = vunpack.c.l.b16 %v128
    %v449 = vunpack.c.l.b16 %v129
    %v450 = vunpack.c.l.b16 %v130
    %v451 = vunpack.c.l.b16 %v131
    %v452 = vunpack.c.l.b16 %v132
    %v453 = vunpack.c.l.b16 %v133
    %v454 = vunpack.c.l.b16 %v134
    %v455 = vunpack.c.l.b16 %v135
    %v456 = vunpack.c.l.b16 %v136
    %v457 = vunpack.c.l.b16 %v137
    %v458 = vunpack.c.l.b16 %v138
    %v459 = vunpack.c.l.b16 %v139
    %v460 = vunpack.c.l.b16 %v140
    %v461 = vunpack.c.l.b16 %v141
    %v462 = vunpack.c.l.b16 %v142
    %v463 = vunpack.c.l.b16 %v143
    %v464 = vunpack.c.l.b16 %v144
    %v465 = vunpack.c.l.b16 %v145
    %v466 = vunpack.c.l.b16 %v146
    %v467 = vunpack.c.l.b16 %v147
    %v468 = vunpack.c.l.b16 %v148
    %v469 = vunpack.c.l.b16 %v149
    %v470 = vunpack.c.l.b16 %v150
    %v471 = vunpack.c.l.b16 %v151
    %v472 = vunpack.c.l.b16 %v152
    %v473 = vunpack.c.l.b16 %v153
    %v474 = vunpack.c.l.b16 %v154
    %v475 = vunpack.c.l.b16 %v155
    %v476 = vunpack.c.l.b16 %v156
    %v477 = vunpack.c.l.b16 %v157
    %v478 = vunpack.c.l.b16 %v158
    %v479 = vunpack.c.l.b16 %v159
    %v480 = vunpack.c.l.b16 %v160
    %v481 = vunpack.c.l.b16 %v161
    %v482 = vunpack.c.l.b16 %v162
    %v483 = vunpack.c.l.b16 %v163
    %v484 = vunpack.c.l.b16 %v164
    %v485 = vunpack.c.l.b16 %v165
    %v486 = vunpack.c.l.b16 %v166
    %v487 = vunpack.c.l.b16 %v167
    %v488 = vunpack.c.l.b16 %v168
    %v489 = vunpack.c.l.b16 %v169
    %v490 = vunpack.c.l.b16 %v170
    %v491 = vunpack.c.l.b16 %v171
    %v492 = vunpack.c.l.b16 %v172
    %v493 = vunpack.c.l.b16 %v173
    %v494 = vunpack.c.l.b16 %v174
    %v495 = vunpack.c.l.b16 %v175
    %v496 = vunpack.c.l.b16 %v176
    %v497 = vunpack.c.l.b16 %v177
    %v498 = vunpack.c.l.b16 %v178
    %v499 = vunpack.c.l.b16 %v179
    %v500 = vunpack.c.l.b16 %v180
    %v501 = vunpack.c.l.b16 %v181
    %v502 = vunpack.c.l.b16 %v182
    %v503 = vunpack.c.l.b16 %v183
    %v504 = vunpack.c.l.b16 %v184
    %v505 = vunpack.c.l.b16 %v185
    %v506 = vunpack.c.l.b16 %v186
    %v507 = vunpack.c.l.b16 %v187
    %v508 = vunpack.c.l.b16 %v188
    %v509 = vunpack.c.l.b16 %v189
    %v510 = vunpack.c.l.b16 %v190
    %v511 = vunpack.c.l.b16 %v191
    %v512 = vunpack.c.l.b16 %v192
    %v513 = vunpack.c.l.b16 %v193
    %v514 = vunpack.c.l.b16 %v194
    %v515 = vunpack.c.l.b16 %v195
    %v516 = vunpack.c.l.b16 %v196
    %v517 = vunpack.c.l.b16 %v197
    %v518 = vunpack.c.l.b16 %v198
    %v519 = vpack.c.b16 %v392, %v391
    %v520 = vpack.c.b16 %v394, %v393
    %v521 = vpack.c.b16 %v396, %v395
    %v522 = vpack.c.b16 %v398, %v397
    %v523 = vpack.c.b16 %v400, %v399
    %v524 = vpack.c.b16 %v402, %v401
    %v525 = vpack.c.b16 %v404, %v403
    %v526 = vpack.c.b16 %v406, %v405
    %v527 = vpack.c.b16 %v408, %v407
    %v528 = vpack.c.b16 %v410, %v409
    %v529 = vpack.c.b16 %v412, %v411
    %v530 = vpack.c.b16 %v414, %v413
    %v531 = vpack.c.b16 %v416, %v415
    %v532 = vpack.c.b16 %v418, %v417
    %v533 = vpack.c.b16 %v420, %v419
    %v534 = vpack.c.b16 %v422, %v421
    %v535 = vpack.c.b16 %v424, %v423
    %v536 = vpack.c.b16 %v426, %v425
    %v537 = vpack.c.b16 %v428, %v427
    %v538 = vpack.c.b16 %v430, %v429
    %v539 = vpack.c.b16 %v432, %v431
    %v540 = vpack.c.b16 %v434, %v433
    %v541 = vpack.c.b16 %v436, %v435
    %v542 = vpack.c.b16 %v438, %v437
    %v543 = vpack.c.b16 %v440, %v439
    %v544 = vpack.c.b16 %v442, %v441
    %v545 = vpack.c.b16 %v444, %v443
    %v546 = vpack.c.b16 %v446, %v445
    %v547 = vpack.c.b16 %v448, %v447
    %v548 = vpack.c.b16 %v450, %v449
    %v549 = vpack.c.b16 %v452, %v451
    %v550 = vpack.c.b16 %v454, %v453
    %v551 = vpack.c.b16 %v456, %v455
    %v552 = vpack.c.b16 %v458, %v457
    %v553 = vpack.c.b16 %v460, %v459
    %v554 = vpack.c.b16 %v462, %v461
    %v555 = vpack.c.b16 %v464, %v463
    %v556 = vpack.c.b16 %v466, %v465
    %v557 = vpack.c.b16 %v468, %v467
    %v558 = vpack.c.b16 %v470, %v469
    %v559 = vpack.c.b16 %v472, %v471
    %v560 = vpack.c.b16 %v474, %v473
    %v561 = vpack.c.b16 %v476, %v475
    %v562 = vpack.c.b16 %v478, %v477
    %v563 = vpack.c.b16 %v480, %v479
    %v564 = vpack.c.b16 %v482, %v481
    %v565 = vpack.c.b16 %v484, %v483
    %v566 = vpack.c.b16 %v486, %v485
    %v567 = vpack.c.b16 %v488, %v487
    %v568 = vpack.c.b16 %v490, %v489
    %v569 = vpack.c.b16 %v492, %v491
    %v570 = vpack.c.b16 %v494, %v493
    %v571 = vpack.c.b16 %v496, %v495
    %v572 = vpack.c.b16 %v498, %v497
    %v573 = vpack.c.b16 %v500, %v499
    %v574 = vpack.c.b16 %v502, %v501
    %v575 = vpack.c.b16 %v504, %v503
    %v576 = vpack.c.b16 %v506, %v505
    %v577 = vpack.c.b16 %v508, %v507
    %v578 = vpack.c.b16 %v510, %v509
    %v579 = vpack.c.b16 %v512, %v511
    %v580 = vpack.c.b16 %v514, %v513
    %v581 = vpack.c.b16 %v516, %v515
    %v582 = vpack.c.b16 %v518, %v517
    %647 = vmatprep.subr.bf16.mxu0 0
    %648 = vmatpush1.bf16.msra.mxu0 %v526
    %649 = vmatprep.subr.bf16.mxu0 0
    %650 = vmatpush1.bf16.msra.mxu0 %v525
    %651 = vmatprep.subr.bf16.mxu0 0
    %652 = vmatpush1.bf16.msra.mxu0 %v524
    %653 = vmatprep.subr.bf16.mxu0 0
    %654 = vmatpush1.bf16.msra.mxu0 %v523
    %655 = vmatprep.subr.bf16.mxu0 0
    %656 = vmatpush1.bf16.msra.mxu0 %v522
    %657 = vmatprep.subr.bf16.mxu0 0
    %658 = vmatpush1.bf16.msra.mxu0 %v521
    %659 = vmatprep.subr.bf16.mxu0 0
    %660 = vmatpush1.bf16.msra.mxu0 %v520
    %661 = vmatprep.subr.bf16.mxu0 0
    %662 = vmatpush1.bf16.msra.mxu0 %v519
    %663 = vmatprep.subr.bf16.mxu0 0
    %664 = vmatpush2.bf16.msra.mxu0 %v534
    %665 = vmatprep.subr.bf16.mxu0 0
    %666 = vmatpush2.bf16.msra.mxu0 %v533
    %667 = vmatprep.subr.bf16.mxu0 0
    %668 = vmatpush2.bf16.msra.mxu0 %v532
    %669 = vmatprep.subr.bf16.mxu0 0
    %670 = vmatpush2.bf16.msra.mxu0 %v531
    %671 = vmatprep.subr.bf16.mxu0 0
    %672 = vmatpush2.bf16.msra.mxu0 %v530
    %673 = vmatprep.subr.bf16.mxu0 0
    %674 = vmatpush2.bf16.msra.mxu0 %v529
    %675 = vmatprep.subr.bf16.mxu0 0
    %676 = vmatpush2.bf16.msra.mxu0 %v528
    %677 = vmatprep.subr.bf16.mxu0 0
    %678 = vmatpush2.bf16.msra.mxu0 %v527
    %679 = vmatprep.mubr.bf16.mxu0 %v248
    %680 = vmatmul.mubr.bf16.gmra.mxu0 %v247
    %v681 = vpop.f32.mrf.mxu0
    %v682 = vadd.f32 %v221, %v681
    %v683 = vpop.f32.mrf.mxu0
    %v684 = vpop.f32.mrf.mxu0
    %v685 = vadd.f32 %v221, %v684
    %v686 = vpop.f32.mrf.mxu0
    %687 = vdwg.mxu0
    %688 = vmatprep.subr.bf16.mxu0 0
    %689 = vmatpush1.bf16.msra.mxu0 %v542
    %690 = vmatprep.subr.bf16.mxu0 0
    %691 = vmatpush1.bf16.msra.mxu0 %v541
    %692 = vmatprep.subr.bf16.mxu0 0
    %693 = vmatpush1.bf16.msra.mxu0 %v540
    %694 = vmatprep.subr.bf16.mxu0 0
    %695 = vmatpush1.bf16.msra.mxu0 %v539
    %696 = vmatprep.subr.bf16.mxu0 0
    %697 = vmatpush1.bf16.msra.mxu0 %v538
    %698 = vmatprep.subr.bf16.mxu0 0
    %699 = vmatpush1.bf16.msra.mxu0 %v537
    %700 = vmatprep.subr.bf16.mxu0 0
    %701 = vmatpush1.bf16.msra.mxu0 %v536
    %702 = vmatprep.subr.bf16.mxu0 0
    %703 = vmatpush1.bf16.msra.mxu0 %v535
    %704 = vmatprep.subr.bf16.mxu0 0
    %705 = vmatpush2.bf16.msra.mxu0 %v550
    %706 = vmatprep.subr.bf16.mxu0 0
    %707 = vmatpush2.bf16.msra.mxu0 %v549
    %708 = vmatprep.subr.bf16.mxu0 0
    %709 = vmatpush2.bf16.msra.mxu0 %v548
    %710 = vmatprep.subr.bf16.mxu0 0
    %711 = vmatpush2.bf16.msra.mxu0 %v547
    %712 = vmatprep.subr.bf16.mxu0 0
    %713 = vmatpush2.bf16.msra.mxu0 %v546
    %714 = vmatprep.subr.bf16.mxu0 0
    %715 = vmatpush2.bf16.msra.mxu0 %v545
    %716 = vmatprep.subr.bf16.mxu0 0
    %717 = vmatpush2.bf16.msra.mxu0 %v544
    %718 = vmatprep.subr.bf16.mxu0 0
    %719 = vmatpush2.bf16.msra.mxu0 %v543
    %720 = vmatprep.mubr.bf16.mxu0 %v250
    %721 = vmatmul.mubr.bf16.gmra.mxu0 %v249
    %v722 = vpop.f32.mrf.mxu0
    %v723 = vadd.f32 %v682, %v722
    %v724 = vpop.f32.mrf.mxu0
    %v725 = vpop.f32.mrf.mxu0
    %v726 = vadd.f32 %v685, %v725
    %v727 = vpop.f32.mrf.mxu0
    %728 = vdwg.mxu0
    %729 = vmatprep.subr.bf16.mxu0 0
    %730 = vmatpush1.bf16.msra.mxu0 %v558
    %731 = vmatprep.subr.bf16.mxu0 0
    %732 = vmatpush1.bf16.msra.mxu0 %v557
    %733 = vmatprep.subr.bf16.mxu0 0
    %734 = vmatpush1.bf16.msra.mxu0 %v556
    %735 = vmatprep.subr.bf16.mxu0 0
    %736 = vmatpush1.bf16.msra.mxu0 %v555
    %737 = vmatprep.subr.bf16.mxu0 0
    %738 = vmatpush1.bf16.msra.mxu0 %v554
    %739 = vmatprep.subr.bf16.mxu0 0
    %740 = vmatpush1.bf16.msra.mxu0 %v553
    %741 = vmatprep.subr.bf16.mxu0 0
    %742 = vmatpush1.bf16.msra.mxu0 %v552
    %743 = vmatprep.subr.bf16.mxu0 0
    %744 = vmatpush1.bf16.msra.mxu0 %v551
    %745 = vmatprep.subr.bf16.mxu0 0
    %746 = vmatpush2.bf16.msra.mxu0 %v566
    %747 = vmatprep.subr.bf16.mxu0 0
    %748 = vmatpush2.bf16.msra.mxu0 %v565
    %749 = vmatprep.subr.bf16.mxu0 0
    %750 = vmatpush2.bf16.msra.mxu0 %v564
    %751 = vmatprep.subr.bf16.mxu0 0
    %752 = vmatpush2.bf16.msra.mxu0 %v563
    %753 = vmatprep.subr.bf16.mxu0 0
    %754 = vmatpush2.bf16.msra.mxu0 %v562
    %755 = vmatprep.subr.bf16.mxu0 0
    %756 = vmatpush2.bf16.msra.mxu0 %v561
    %757 = vmatprep.subr.bf16.mxu0 0
    %758 = vmatpush2.bf16.msra.mxu0 %v560
    %759 = vmatprep.subr.bf16.mxu0 0
    %760 = vmatpush2.bf16.msra.mxu0 %v559
    %761 = vmatprep.mubr.bf16.mxu0 %v252
    %762 = vmatmul.mubr.bf16.gmra.mxu0 %v251
    %v763 = vpop.f32.mrf.mxu0
    %v764 = vadd.f32 %v723, %v763
    %v765 = vpop.f32.mrf.mxu0
    %v766 = vpop.f32.mrf.mxu0
    %v767 = vadd.f32 %v726, %v766
    %v768 = vpop.f32.mrf.mxu0
    %769 = vdwg.mxu0
    %770 = vmatprep.subr.bf16.mxu0 0
    %771 = vmatpush1.bf16.msra.mxu0 %v574
    %772 = vmatprep.subr.bf16.mxu0 0
    %773 = vmatpush1.bf16.msra.mxu0 %v573
    %774 = vmatprep.subr.bf16.mxu0 0
    %775 = vmatpush1.bf16.msra.mxu0 %v572
    %776 = vmatprep.subr.bf16.mxu0 0
    %777 = vmatpush1.bf16.msra.mxu0 %v571
    %778 = vmatprep.subr.bf16.mxu0 0
    %779 = vmatpush1.bf16.msra.mxu0 %v570
    %780 = vmatprep.subr.bf16.mxu0 0
    %781 = vmatpush1.bf16.msra.mxu0 %v569
    %782 = vmatprep.subr.bf16.mxu0 0
    %783 = vmatpush1.bf16.msra.mxu0 %v568
    %784 = vmatprep.subr.bf16.mxu0 0
    %785 = vmatpush1.bf16.msra.mxu0 %v567
    %786 = vmatprep.subr.bf16.mxu0 0
    %787 = vmatpush2.bf16.msra.mxu0 %v582
    %788 = vmatprep.subr.bf16.mxu0 0
    %789 = vmatpush2.bf16.msra.mxu0 %v581
    %790 = vmatprep.subr.bf16.mxu0 0
    %791 = vmatpush2.bf16.msra.mxu0 %v580
    %792 = vmatprep.subr.bf16.mxu0 0
    %793 = vmatpush2.bf16.msra.mxu0 %v579
    %794 = vmatprep.subr.bf16.mxu0 0
    %795 = vmatpush2.bf16.msra.mxu0 %v578
    %796 = vmatprep.subr.bf16.mxu0 0
    %797 = vmatpush2.bf16.msra.mxu0 %v577
    %798 = vmatprep.subr.bf16.mxu0 0
    %799 = vmatpush2.bf16.msra.mxu0 %v576
    %800 = vmatprep.subr.bf16.mxu0 0
    %801 = vmatpush2.bf16.msra.mxu0 %v575
    %802 = vmatprep.mubr.bf16.mxu0 %v254
    %803 = vmatmul.mubr.bf16.gmra.mxu0 %v253
    %v804 = vpop.f32.mrf.mxu0
    %v805 = vadd.f32 %v764, %v804
    %v806 = vpop.f32.mrf.mxu0
    %v807 = vpop.f32.mrf.mxu0
    %v808 = vadd.f32 %v767, %v807
    %v809 = vpop.f32.mrf.mxu0
    %810 = vdwg.mxu0
    %v811 = vmax.f32 %v805, 0.0
    %v812 = vmax.f32 %v808, 0.0
    %v813 = vpack.c.bf16 %v812, %v811
    %v815 = vlaneseq
    %v816 = vshrl.u32 %v815, 7
    %v817 = vsub.s32 0, %v816
    %v818 = vrot.slane %v216, %v817
    %v836 = vunpack.c.l.b16 %v200
    %v837 = vunpack.c.l.b16 %v201
    %v838 = vunpack.c.l.b16 %v202
    %v839 = vunpack.c.l.b16 %v203
    %v840 = vunpack.c.l.b16 %v204
    %v841 = vunpack.c.l.b16 %v205
    %v842 = vunpack.c.l.b16 %v206
    %v843 = vunpack.c.l.b16 %v207
    %v844 = vunpack.c.l.b16 %v208
    %v845 = vunpack.c.l.b16 %v209
    %v846 = vunpack.c.l.b16 %v210
    %v847 = vunpack.c.l.b16 %v211
    %v848 = vunpack.c.l.b16 %v212
    %v849 = vunpack.c.l.b16 %v213
    %v850 = vunpack.c.l.b16 %v214
    %v851 = vunpack.c.l.b16 %v215
    %v852 = vpack.c.b16 %v837, %v836
    %v853 = vpack.c.b16 %v839, %v838
    %v854 = vpack.c.b16 %v841, %v840
    %v855 = vpack.c.b16 %v843, %v842
    %v856 = vpack.c.b16 %v845, %v844
    %v857 = vpack.c.b16 %v847, %v846
    %v858 = vpack.c.b16 %v849, %v848
    %v859 = vpack.c.b16 %v851, %v850
    %868 = vmatprep.subr.bf16.mxu0 0
    %869 = vmatpush1.bf16.msra.mxu0 %v859
    %870 = vmatprep.subr.bf16.mxu0 0
    %871 = vmatpush1.bf16.msra.mxu0 %v858
    %872 = vmatprep.subr.bf16.mxu0 0
    %873 = vmatpush1.bf16.msra.mxu0 %v857
    %874 = vmatprep.subr.bf16.mxu0 0
    %875 = vmatpush1.bf16.msra.mxu0 %v856
    %876 = vmatprep.subr.bf16.mxu0 0
    %877 = vmatpush1.bf16.msra.mxu0 %v855
    %878 = vmatprep.subr.bf16.mxu0 0
    %879 = vmatpush1.bf16.msra.mxu0 %v854
    %880 = vmatprep.subr.bf16.mxu0 0
    %881 = vmatpush1.bf16.msra.mxu0 %v853
    %882 = vmatprep.subr.bf16.mxu0 0
    %883 = vmatpush1.bf16.msra.mxu0 %v852
    %884 = vmatprep.subr.bf16.mxu0 0
    %885 = vmatpush2.bf16.msra.mxu0 0
    %886 = vmatprep.subr.bf16.mxu0 0
    %887 = vmatpush2.bf16.msra.mxu0 0
    %888 = vmatprep.subr.bf16.mxu0 0
    %889 = vmatpush2.bf16.msra.mxu0 0
    %890 = vmatprep.subr.bf16.mxu0 0
    %891 = vmatpush2.bf16.msra.mxu0 0
    %892 = vmatprep.subr.bf16.mxu0 0
    %893 = vmatpush2.bf16.msra.mxu0 0
    %894 = vmatprep.subr.bf16.mxu0 0
    %895 = vmatpush2.bf16.msra.mxu0 0
    %896 = vmatprep.subr.bf16.mxu0 0
    %897 = vmatpush2.bf16.msra.mxu0 0
    %898 = vmatprep.subr.bf16.mxu0 0
    %899 = vmatpush2.bf16.msra.mxu0 0
    %900 = vmatprep.mubr.bf16.mxu0 0
    %901 = vmatmul.mubr.bf16.gmra.mxu0 %v813
    %v902 = vpop.f32.mrf.mxu0
    %v903 = vadd.f32 %v818, %v902
    %v904 = vpop.f32.mrf.mxu0
    %v905 = vpop.f32.mrf.mxu0
    %v906 = vadd.f32 %v818, %v905
    %v907 = vpop.f32.mrf.mxu0
    %908 = vdwg.mxu0
    %909 = vst [vmem:[#allocation8] sm:$0xff] %v903
    %910 = vst [vmem:[#allocation8 + $0x8] sm:$0xff] %v906
    // Predicated region
    $region34: #{tpu_custom_call.1} parent=1 // pred_check
      _
    $region35: #{tpu_custom_call.1} parent=1 // pred_check_branch
      %912 = sbr.rel (0) target = $region37
    $region36: #{tpu_custom_call.1} parent=1 // pred_region
      %s914 = ssub.s32 256, 256
      %915 = vsyncadd [#allocation4], %s914
      %s916 = sshll.u32 [#allocation8], 4
      %s917 = int_to_ptr.vmem [resolvable:$true] %s916
      %922 = dma.vmem_to_hbm [thread:$0]  %s917, 256, %s5, [#allocation4], 128, 128, 8
    $region37: #{tpu_custom_call.1} parent=1 // pred_fallthru
      _
    // Predicated region
    $region38: #{tpu_custom_call.1} parent=1 // pred_check
      _
    $region39: #{tpu_custom_call.1} parent=1 // pred_check_branch
      %924 = sbr.rel (0) target = $region41
    $region40: #{tpu_custom_call.1} parent=1 // pred_region
      %925 = dma.done [#allocation4], 256
    $region41: #{tpu_custom_call.1} parent=1 // pred_fallthru
      _
    %926 = vsyncpa [#allocation3], 1
    %927 = vsyncpa [#allocation6], 1
    %928 = vsyncpa [#allocation4], 1

</llo_original>
